<compile_context>
chip_gen: v7x
topology: tpu7x:2x2x1
jax: 0.10.0
libtpu: 0.0.40
codegen_flags: <defaults>
</compile_context>

<pallas_src>
import functools

import jax
import jax.numpy as jnp
import numpy as np
from jax.experimental import pallas as pl
from jax.experimental.pallas import tpu as pltpu

ALPHA = 0.5
EPS = 1e-07
LANES = 128
DEFAULT_S = 256      # sublane blocks per tile -> 256 * 128 = 32768 positions
NUM_CORES = 2        # leading "parallel" grid axis (megacore on v7x)


def _xedice_kernel(logits_ref, tgt_ref, acc_ref, *, S, HW, Jh, J):
    # logits_ref: (1, C, S, 128)    tgt_ref: (1, S, 128) int32
    # acc_ref   : (1, 4, 8, 128) f32 resident accumulator,
    #             rows = [xe_sum, intersection, p1_sum, t1_sum]
    g = pl.program_id(0)
    n = pl.program_id(1)
    j = pl.program_id(2)

    @pl.when(jnp.logical_and(n == 0, j == 0))
    def _():
        acc_ref[...] = jnp.zeros_like(acc_ref)

    j_global = g * Jh + j

    # Blocks past the real lane-block count (clamped duplicates produced by the
    # core split) contribute nothing: skip their compute entirely.
    @pl.when(j_global < J)
    def _():
        logits = logits_ref[0].astype(jnp.float32)       # (C, S, 128)
        tgt = tgt_ref[0]                                 # (S, 128) int32

        # Validity mask (static HW): covers lane padding and the ragged last
        # sublane block.
        row = jax.lax.broadcasted_iota(jnp.int32, (S, LANES), 0)
        lane = jax.lax.broadcasted_iota(jnp.int32, (S, LANES), 1)
        pos = (j_global * S + row) * LANES + lane
        valid = pos < HW

        # Numerically stable softmax over the leading (untiled) class axis:
        # max/sum over axis 0 are elementwise VPU ops across C vregs.
        m = jnp.max(logits, axis=0)                      # (S, 128)
        e = jnp.exp(logits - m[None])                    # (C, S, 128)
        s = jnp.sum(e, axis=0)                           # (S, 128)
        inv_s = pl.reciprocal(s, approx=True)            # EUP approx-reciprocal

        # Logit of the target class via one-hot select (C is tiny).
        class_ids = jax.lax.broadcasted_iota(jnp.int32, logits.shape, 0)
        logit_t = jnp.sum(jnp.where(class_ids == tgt[None], logits, 0.0), axis=0)

        xe = jnp.where(valid, jnp.log(s) + m - logit_t, 0.0)  # per-position CE
        p1 = jnp.where(valid, e[1] * inv_s, 0.0)              # softmax prob, class 1
        t1 = jnp.where(valid & (tgt == 1), 1.0, 0.0)          # binary target

        def accumulate(k, x):
            if S % 8 == 0:
                # (S,128) -> (S//8, 8, 128) is vreg-aligned; sum(axis=0) is VPU.
                acc_ref[0, k] += jnp.sum(x.reshape(S // 8, 8, LANES), axis=0)
            else:
                # Tiny-input fallback (S < 8, block equals the full array dim).
                acc_ref[0, k, 0:S, :] += x

        accumulate(0, xe)
        accumulate(1, p1 * t1)
        accumulate(2, p1)
        accumulate(3, t1)


def xedice_loss(preds, targets, *, alpha=ALPHA, eps=EPS, block_s=DEFAULT_S):
    """preds: (N, C, H, W) float; targets: (N, H, W) int class labels."""
    N, C, H, W = preds.shape
    if C < 2:
        raise ValueError("XEDiceLoss needs C >= 2 (dice uses softmax class 1).")
    HW = H * W

    logits = preds.reshape(N, C, HW)                 # free reshape, no transpose
    tgt = targets.reshape(N, HW).astype(jnp.int32)

    # Lane padding only when H*W is not a multiple of 128 (padded positions are
    # masked in-kernel, so pad values are irrelevant).
    HWp = ((HW + LANES - 1) // LANES) * LANES
    if HWp != HW:
        logits = jnp.pad(logits, ((0, 0), (0, 0), (0, HWp - HW)))
        tgt = jnp.pad(tgt, ((0, 0), (0, HWp - HW)))
    Sp = HWp // LANES

    logits = logits.reshape(N, C, Sp, LANES)
    tgt = tgt.reshape(N, Sp, LANES)

    # Sublane block size: a multiple of 8 (or the full dim when Sp < 8).
    if Sp <= 8:
        S = Sp
    else:
        S = min(block_s, (Sp // 8) * 8)
    J = pl.cdiv(Sp, S)                 # lane blocks per image

    # Only spend the extra "parallel" axis when there is enough work to split.
    num_cores = NUM_CORES if J >= NUM_CORES else 1
    Jh = pl.cdiv(J, num_cores)         # lane blocks per core slice
    last_block = J - 1

    kernel = functools.partial(_xedice_kernel, S=S, HW=HW, Jh=Jh, J=J)

    def logits_map(g, n, j):
        return (n, 0, jnp.minimum(g * Jh + j, last_block), 0)

    def tgt_map(g, n, j):
        return (n, jnp.minimum(g * Jh + j, last_block), 0)

    acc = pl.pallas_call(
        kernel,
        out_shape=jax.ShapeDtypeStruct((num_cores, 4, 8, LANES), jnp.float32),
        grid=(num_cores, N, Jh),
        in_specs=[
            pl.BlockSpec((1, C, S, LANES), logits_map),
            pl.BlockSpec((1, S, LANES), tgt_map),
        ],
        out_specs=pl.BlockSpec((1, 4, 8, LANES), lambda g, n, j: (g, 0, 0, 0)),
        compiler_params=pltpu.CompilerParams(
            dimension_semantics=("parallel", "arbitrary", "arbitrary")),
    )(logits, tgt)

    sums = jnp.sum(acc, axis=(0, 2, 3))              # (4,) cheap final reduce
    xe_sum, inter, p_sum, t_sum = sums[0], sums[1], sums[2], sums[3]
    xe_loss = xe_sum / jnp.float32(N * HW)           # CrossEntropyLoss 'mean'
    dice_loss = 1.0 - 2.0 * inter / (p_sum + t_sum + eps)
    return alpha * xe_loss + (1.0 - alpha) * dice_loss


def _ref_loss(preds, targets, alpha=ALPHA, eps=EPS):
    # pure-JAX reference of the PyTorch forward, for a sanity check
    logp = jax.nn.log_softmax(preds.astype(jnp.float32), axis=1)
    xe = -jnp.take_along_axis(
        logp, targets[:, None, :, :].astype(jnp.int32), axis=1)[:, 0]
    xe_loss = jnp.mean(xe)
    p1 = jax.nn.softmax(preds.astype(jnp.float32), axis=1)[:, 1]
    t1 = (targets == 1).astype(jnp.float32)
    inter = jnp.sum(p1 * t1)
    union = jnp.sum(p1) + jnp.sum(t1)
    dice = 1.0 - 2.0 * inter / (union + eps)
    return alpha * xe_loss + (1.0 - alpha) * dice


if __name__ == "__main__":
    key = jax.random.PRNGKey(0)
    k1, k2 = jax.random.split(key)
    N, C, H, W = 2, 4, 16, 16
    preds = jax.random.normal(k1, (N, C, H, W), dtype=jnp.float32)
    targets = jax.random.randint(k2, (N, H, W), 0, C, dtype=jnp.int32)

    out = jax.jit(xedice_loss)(preds, targets)
    out = jax.block_until_ready(out)

    ref = jax.block_until_ready(_ref_loss(preds, targets))
    np.testing.assert_allclose(np.asarray(out), np.asarray(ref),
                               rtol=1e-4, atol=1e-5)
    print("KERNEL_OK")
</pallas_src>

<mosaic_0001>
module attributes {stable_mosaic.version = 11 : i64} {
  func.func @_xedice_kernel(%arg0: i32, %arg1: i32, %arg2: i32, %arg3: memref<1x4x2x128xf32, #tpu.memory_space<vmem>>, %arg4: memref<1x2x128xi32, #tpu.memory_space<vmem>>, %arg5: memref<1x4x8x128xf32, #tpu.memory_space<vmem>>) attributes {dimension_semantics = [#tpu.dimension_semantics<parallel>, #tpu.dimension_semantics<arbitrary>, #tpu.dimension_semantics<arbitrary>], iteration_bounds = array<i64: 1, 2, 1>, scalar_prefetch = 0 : i64, scratch_operands = 0 : i64, tpu.core_type = #tpu.core_type<tc>, window_params = [{transform_indices = @transform_0, window_bounds = array<i64: 1, 4, 2, 128>}, {transform_indices = @transform_1, window_bounds = array<i64: 1, 2, 128>}, {transform_indices = @transform_2, window_bounds = array<i64: 1, 4, 8, 128>}]} {
    %c0_i32 = arith.constant 0 : i32
    %0 = arith.cmpi eq, %arg1, %c0_i32 : i32
    %c0_i32_0 = arith.constant 0 : i32
    %1 = arith.cmpi eq, %arg2, %c0_i32_0 : i32
    %2 = arith.andi %0, %1 : i1
    %3 = arith.extui %2 : i1 to i32
    %c0_i32_1 = arith.constant 0 : i32
    %4 = arith.cmpi ne, %3, %c0_i32_1 : i32
    scf.if %4 {
      %cst = arith.constant 0.000000e+00 : f32
      %10 = vector.broadcast %cst : f32 to vector<1x4x8x128xf32>
      %c0 = arith.constant 0 : index
      %c0_4 = arith.constant 0 : index
      %c0_5 = arith.constant 0 : index
      %c0_6 = arith.constant 0 : index
      %11 = vector.load %arg5[%c0, %c0_4, %c0_5, %c0_6] : memref<1x4x8x128xf32, #tpu.memory_space<vmem>>, vector<1x4x8x128xf32>
      tpu.vector_store %arg5[%c0, %c0_4, %c0_5, %c0_6], %10 {strides = array<i32>} : memref<1x4x8x128xf32, #tpu.memory_space<vmem>>, vector<1x4x8x128xf32>,
    } else {
    }
    %c1_i32 = arith.constant 1 : i32
    %5 = arith.muli %arg0, %c1_i32 : i32
    %6 = arith.addi %5, %arg2 : i32
    %c1_i32_2 = arith.constant 1 : i32
    %7 = arith.cmpi slt, %6, %c1_i32_2 : i32
    %8 = arith.extui %7 : i1 to i32
    %c0_i32_3 = arith.constant 0 : i32
    %9 = arith.cmpi ne, %8, %c0_i32_3 : i32
    scf.if %9 {
      %c0 = arith.constant 0 : index
      %c0_4 = arith.constant 0 : index
      %c0_5 = arith.constant 0 : index
      %c0_6 = arith.constant 0 : index
      %10 = vector.load %arg3[%c0, %c0_4, %c0_5, %c0_6] : memref<1x4x2x128xf32, #tpu.memory_space<vmem>>, vector<1x4x2x128xf32>
      %11 = vector.shape_cast %10 : vector<1x4x2x128xf32> to vector<4x2x128xf32>
      %c0_7 = arith.constant 0 : index
      %c0_8 = arith.constant 0 : index
      %c0_9 = arith.constant 0 : index
      %12 = vector.load %arg4[%c0_7, %c0_8, %c0_9] : memref<1x2x128xi32, #tpu.memory_space<vmem>>, vector<1x2x128xi32>
      %13 = vector.shape_cast %12 : vector<1x2x128xi32> to vector<2x128xi32>
      %14 = tpu.iota {dimensions = array<i32: 0>} : vector<2x128xi32>
      %15 = tpu.iota {dimensions = array<i32: 1>} : vector<2x128xi32>
      %c2_i32 = arith.constant 2 : i32
      %16 = arith.muli %6, %c2_i32 : i32
      %17 = vector.broadcast %16 : i32 to vector<2x128xi32>
      %18 = arith.addi %17, %14 : vector<2x128xi32>
      %c128_i32 = arith.constant 128 : i32
      %19 = vector.broadcast %c128_i32 : i32 to vector<2x128xi32>
      %20 = arith.muli %18, %19 : vector<2x128xi32>
      %21 = arith.addi %20, %15 : vector<2x128xi32>
      %c256_i32 = arith.constant 256 : i32
      %22 = vector.broadcast %c256_i32 : i32 to vector<2x128xi32>
      %23 = arith.cmpi slt, %21, %22 : vector<2x128xi32>
      %cst = arith.constant dense<0xFF800000> : vector<2x128xf32>
      %24 = vector.multi_reduction <maximumf>, %11, %cst [0] : vector<4x2x128xf32> to vector<2x128xf32>
      %25 = vector.shape_cast %24 : vector<2x128xf32> to vector<1x2x128xf32>
      %26 = vector.broadcast %25 : vector<1x2x128xf32> to vector<4x2x128xf32>
      %27 = arith.subf %11, %26 : vector<4x2x128xf32>
      %28 = math.exp %27 : vector<4x2x128xf32>
      %cst_10 = arith.constant dense<0.000000e+00> : vector<2x128xf32>
      %29 = vector.multi_reduction <add>, %28, %cst_10 [0] : vector<4x2x128xf32> to vector<2x128xf32>
      %30 = tpu.reciprocal %29 {approx = true} : vector<2x128xf32> -> vector<2x128xf32>
      %31 = tpu.iota {dimensions = array<i32: 0>} : vector<4x2x128xi32>
      %32 = vector.shape_cast %13 : vector<2x128xi32> to vector<1x2x128xi32>
      %33 = vector.broadcast %32 : vector<1x2x128xi32> to vector<4x2x128xi32>
      %34 = arith.cmpi eq, %31, %33 : vector<4x2x128xi32>
      %cst_11 = arith.constant 0.000000e+00 : f32
      %35 = vector.broadcast %cst_11 : f32 to vector<4x2x128xf32>
      %36 = arith.select %34, %11, %35 : vector<4x2x128xi1>, vector<4x2x128xf32>
      %cst_12 = arith.constant dense<0.000000e+00> : vector<2x128xf32>
      %37 = vector.multi_reduction <add>, %36, %cst_12 [0] : vector<4x2x128xf32> to vector<2x128xf32>
      %38 = math.log %29 : vector<2x128xf32>
      %39 = arith.addf %38, %24 : vector<2x128xf32>
      %40 = arith.subf %39, %37 : vector<2x128xf32>
      %cst_13 = arith.constant 0.000000e+00 : f32
      %41 = vector.broadcast %cst_13 : f32 to vector<2x128xf32>
      %42 = arith.select %23, %40, %41 : vector<2x128xi1>, vector<2x128xf32>
      %43 = vector.extract_strided_slice %28 {offsets = [1, 0, 0], sizes = [1, 2, 128], strides = [1, 1, 1]} : vector<4x2x128xf32> to vector<1x2x128xf32>
      %44 = vector.shape_cast %43 : vector<1x2x128xf32> to vector<2x128xf32>
      %45 = arith.mulf %44, %30 : vector<2x128xf32>
      %cst_14 = arith.constant 0.000000e+00 : f32
      %46 = vector.broadcast %cst_14 : f32 to vector<2x128xf32>
      %47 = arith.select %23, %45, %46 : vector<2x128xi1>, vector<2x128xf32>
      %c1_i32_15 = arith.constant 1 : i32
      %48 = vector.broadcast %c1_i32_15 : i32 to vector<2x128xi32>
      %49 = arith.cmpi eq, %13, %48 : vector<2x128xi32>
      %50 = arith.andi %23, %49 : vector<2x128xi1>
      %cst_16 = arith.constant 1.000000e+00 : f32
      %cst_17 = arith.constant 0.000000e+00 : f32
      %51 = vector.broadcast %cst_16 : f32 to vector<2x128xf32>
      %52 = vector.broadcast %cst_17 : f32 to vector<2x128xf32>
      %53 = arith.select %50, %51, %52 : vector<2x128xi1>, vector<2x128xf32>
      %c0_18 = arith.constant 0 : index
      %c0_19 = arith.constant 0 : index
      %c0_20 = arith.constant 0 : index
      %c0_21 = arith.constant 0 : index
      %54 = vector.load %arg5[%c0_18, %c0_19, %c0_20, %c0_21] : memref<1x4x8x128xf32, #tpu.memory_space<vmem>>, vector<1x1x2x128xf32>
      %55 = vector.shape_cast %54 : vector<1x1x2x128xf32> to vector<2x128xf32>
      %56 = arith.addf %55, %42 : vector<2x128xf32>
      %c0_22 = arith.constant 0 : index
      %c0_23 = arith.constant 0 : index
      %c0_24 = arith.constant 0 : index
      %c0_25 = arith.constant 0 : index
      %57 = vector.load %arg5[%c0_22, %c0_23, %c0_24, %c0_25] : memref<1x4x8x128xf32, #tpu.memory_space<vmem>>, vector<1x1x2x128xf32>
      %58 = vector.shape_cast %57 : vector<1x1x2x128xf32> to vector<2x128xf32>
      %59 = vector.shape_cast %56 : vector<2x128xf32> to vector<1x1x2x128xf32>
      tpu.vector_store %arg5[%c0_22, %c0_23, %c0_24, %c0_25], %59 {strides = array<i32>} : memref<1x4x8x128xf32, #tpu.memory_space<vmem>>, vector<1x1x2x128xf32>,
      %60 = arith.mulf %47, %53 : vector<2x128xf32>
      %c0_26 = arith.constant 0 : index
      %c1 = arith.constant 1 : index
      %c0_27 = arith.constant 0 : index
      %c0_28 = arith.constant 0 : index
      %61 = vector.load %arg5[%c0_26, %c1, %c0_27, %c0_28] : memref<1x4x8x128xf32, #tpu.memory_space<vmem>>, vector<1x1x2x128xf32>
      %62 = vector.shape_cast %61 : vector<1x1x2x128xf32> to vector<2x128xf32>
      %63 = arith.addf %62, %60 : vector<2x128xf32>
      %c0_29 = arith.constant 0 : index
      %c1_30 = arith.constant 1 : index
      %c0_31 = arith.constant 0 : index
      %c0_32 = arith.constant 0 : index
      %64 = vector.load %arg5[%c0_29, %c1_30, %c0_31, %c0_32] : memref<1x4x8x128xf32, #tpu.memory_space<vmem>>, vector<1x1x2x128xf32>
      %65 = vector.shape_cast %64 : vector<1x1x2x128xf32> to vector<2x128xf32>
      %66 = vector.shape_cast %63 : vector<2x128xf32> to vector<1x1x2x128xf32>
      tpu.vector_store %arg5[%c0_29, %c1_30, %c0_31, %c0_32], %66 {strides = array<i32>} : memref<1x4x8x128xf32, #tpu.memory_space<vmem>>, vector<1x1x2x128xf32>,
      %c0_33 = arith.constant 0 : index
      %c2 = arith.constant 2 : index
      %c0_34 = arith.constant 0 : index
      %c0_35 = arith.constant 0 : index
      %67 = vector.load %arg5[%c0_33, %c2, %c0_34, %c0_35] : memref<1x4x8x128xf32, #tpu.memory_space<vmem>>, vector<1x1x2x128xf32>
      %68 = vector.shape_cast %67 : vector<1x1x2x128xf32> to vector<2x128xf32>
      %69 = arith.addf %68, %47 : vector<2x128xf32>
      %c0_36 = arith.constant 0 : index
      %c2_37 = arith.constant 2 : index
      %c0_38 = arith.constant 0 : index
      %c0_39 = arith.constant 0 : index
      %70 = vector.load %arg5[%c0_36, %c2_37, %c0_38, %c0_39] : memref<1x4x8x128xf32, #tpu.memory_space<vmem>>, vector<1x1x2x128xf32>
      %71 = vector.shape_cast %70 : vector<1x1x2x128xf32> to vector<2x128xf32>
      %72 = vector.shape_cast %69 : vector<2x128xf32> to vector<1x1x2x128xf32>
      tpu.vector_store %arg5[%c0_36, %c2_37, %c0_38, %c0_39], %72 {strides = array<i32>} : memref<1x4x8x128xf32, #tpu.memory_space<vmem>>, vector<1x1x2x128xf32>,
      %c0_40 = arith.constant 0 : index
      %c3 = arith.constant 3 : index
      %c0_41 = arith.constant 0 : index
      %c0_42 = arith.constant 0 : index
      %73 = vector.load %arg5[%c0_40, %c3, %c0_41, %c0_42] : memref<1x4x8x128xf32, #tpu.memory_space<vmem>>, vector<1x1x2x128xf32>
      %74 = vector.shape_cast %73 : vector<1x1x2x128xf32> to vector<2x128xf32>
      %75 = arith.addf %74, %53 : vector<2x128xf32>
      %c0_43 = arith.constant 0 : index
      %c3_44 = arith.constant 3 : index
      %c0_45 = arith.constant 0 : index
      %c0_46 = arith.constant 0 : index
      %76 = vector.load %arg5[%c0_43, %c3_44, %c0_45, %c0_46] : memref<1x4x8x128xf32, #tpu.memory_space<vmem>>, vector<1x1x2x128xf32>
      %77 = vector.shape_cast %76 : vector<1x1x2x128xf32> to vector<2x128xf32>
      %78 = vector.shape_cast %75 : vector<2x128xf32> to vector<1x1x2x128xf32>
      tpu.vector_store %arg5[%c0_43, %c3_44, %c0_45, %c0_46], %78 {strides = array<i32>} : memref<1x4x8x128xf32, #tpu.memory_space<vmem>>, vector<1x1x2x128xf32>,
    } else {
    }
    return
  }
  func.func @transform_0(%arg0: i32, %arg1: i32, %arg2: i32) -> (i32, i32, i32, i32) {
    %c1_i32 = arith.constant 1 : i32
    %0 = arith.muli %arg0, %c1_i32 : i32
    %1 = arith.addi %0, %arg2 : i32
    %c0_i32 = arith.constant 0 : i32
    %2 = arith.minsi %1, %c0_i32 : i32
    %c0_i32_0 = arith.constant 0 : i32
    %c0_i32_1 = arith.constant 0 : i32
    %c0_i32_2 = arith.constant 0 : i32
    return %arg1, %c0_i32_0, %2, %c0_i32_1 : i32, i32, i32, i32
  }
  func.func @transform_1(%arg0: i32, %arg1: i32, %arg2: i32) -> (i32, i32, i32) {
    %c1_i32 = arith.constant 1 : i32
    %0 = arith.muli %arg0, %c1_i32 : i32
    %1 = arith.addi %0, %arg2 : i32
    %c0_i32 = arith.constant 0 : i32
    %2 = arith.minsi %1, %c0_i32 : i32
    %c0_i32_0 = arith.constant 0 : i32
    %c0_i32_1 = arith.constant 0 : i32
    return %arg1, %2, %c0_i32_0 : i32, i32, i32
  }
  func.func @transform_2(%arg0: i32, %arg1: i32, %arg2: i32) -> (i32, i32, i32, i32) {
    %c0_i32 = arith.constant 0 : i32
    %c0_i32_0 = arith.constant 0 : i32
    %c0_i32_1 = arith.constant 0 : i32
    %c0_i32_2 = arith.constant 0 : i32
    return %arg0, %c0_i32, %c0_i32_0, %c0_i32_1 : i32, i32, i32, i32
  }
}

</mosaic_0001>

<llo_original>
// kernel: xedice_loss.1
$region0: #{xedice_loss.1}
  #allocation0 [shape = 'u32[]', space=smem, size = 0x4, offset = 0x4, fixed_abs, tag = 'smem constant byte address 0x4 - core index']
  #allocation1 [shape = 'u32[144,128]{1,0:T(1,128)}', space=vmem, size = 0x12000, scoped, tag = 'internal scratch']
  %s0 = inlined_call_operand.vmem [shape: f32[2,4,2,128], index: 0, kind: input, shape index: {}]
  %s1 = inlined_call_operand.vmem [shape: s32[2,2,128], index: 1, kind: input, shape index: {}]
  %s2 = inlined_call_operand.vmem [shape: f32[1,4,8,128], index: 2, kind: output, shape index: {}]
  %s3 = sld [smem:[#allocation0]]
  $region49: #{xedice_loss.1} parent=0
    _
  %s5 = ssub.s32 1, %s3
  %s6 = scalar_select 0, %s5, %s3
  loop: start=0, step=1, limit=4
  $region2: #{xedice_loss.1} parent=0 // loop_pre_header
    _
  $region3: #{xedice_loss.1} parent=0 // loop_header
    %s8 = sphi 0, %s12
    %p9 = scmp.ge.s32.totalorder %s8, 4
    %s15 = sphi 0, %s34
    %s16 = sphi 0, %s30
    %s17 = sphi 0, %s26
    %s18 = sphi 0, %s15
    %s19 = sphi 0, %s16
    %s20 = sphi 0, %s17
    %s21 = sphi 0, %s18
    %s22 = sphi 0, %s19
    %s23 = sphi 0, %s20
    %s45 = sphi 0, %s47
    %s48 = sphi 0, %s45
    %s49 = sphi 0, %s48
    %s65 = sphi 0, %s49
    %s79 = sphi 0, %s81
    %s82 = sphi 0, %s79
    %s83 = sphi 0, %s82
    %s99 = sphi 0, %s83
    %s105 = sphi 0, %s107
    %s108 = sphi 0, %s105
    %s109 = sphi 0, %s108
    %s125 = sphi 0, %s109
  $region4: #{xedice_loss.1} parent=0 // loop_header_branch
    %11 = sbr.rel (%p9) target = $region8
  $region5: #{xedice_loss.1} parent=0 // loop_body
    %s13 = ssub.s32 %s8, 1
    %s14 = ssub.s32 %s8, 2
    %s24 = sadd.s32 1, %s17
    %p25 = scmp.ge.s32.totalorder %s24, 1
    %s26 = scalar_select %p25, 0, %s24
    %s27 = sadd.s32 1, %s16
    %s28 = scalar_select %p25, %s27, %s16
    %p29 = scmp.ge.s32.totalorder %s28, 2
    %s30 = scalar_select %p29, 0, %s28
    %s31 = sadd.s32 1, %s15
    %s32 = scalar_select %p29, %s31, %s15
    %p33 = scmp.ge.s32.totalorder %s32, 1
    %s34 = scalar_select %p33, 0, %s32
    %s35 = sadd.s32 %s15, %s17
    %p36 = scmp.lt.s32.totalorder %s35, 0
    %s37 = scalar_select %p36, %s35, 0
    %s38 = sadd.s32 %s34, %s26
    %p39 = scmp.lt.s32.totalorder %s38, 0
    %s40 = scalar_select %p39, %s38, 0
    %s41 = ssub.s32 %s16, %s30
    %s42 = ssub.s32 %s37, %s40
    %s43 = sor.u32 %s41, %s42
    %p44 = scmp.eq.s32.totalorder %s43, 0
    %s46 = sadd.s32 %s45, 1
    %s47 = scalar_select %p44, %s45, %s46
    %p50 = pneg %p44
    %p51 = scmp.eq.s32.totalorder %s8, 1
    %p52 = por %p50, %p51
    %p53 = scmp.ne.s32.totalorder %s45, %s48
    %p54 = scmp.eq.s32.totalorder %s8, 0
    %p55 = por %p53, %p54
    %p56 = scmp.ne.s32.totalorder %s45, %s48
    %p57 = scmp.eq.s32.totalorder %s13, 1
    %p58 = por %p56, %p57
    %p59 = scmp.ne.s32.totalorder %s48, %s49
    %p60 = scmp.eq.s32.totalorder %s13, 0
    %p61 = por %p59, %p60
    %p62 = scmp.ne.s32.totalorder %s48, %s49
    %p63 = scmp.eq.s32.totalorder %s14, 1
    %p64 = por %p62, %p63
    %p66 = scmp.ne.s32.totalorder %s49, %s65
    %p67 = scmp.eq.s32.totalorder %s14, 0
    %p68 = por %p66, %p67
    %s69 = sadd.s32 %s15, %s17
    %p70 = scmp.lt.s32.totalorder %s69, 0
    %s71 = scalar_select %p70, %s69, 0
    %s72 = sadd.s32 %s34, %s26
    %p73 = scmp.lt.s32.totalorder %s72, 0
    %s74 = scalar_select %p73, %s72, 0
    %s75 = ssub.s32 %s16, %s30
    %s76 = ssub.s32 %s71, %s74
    %s77 = sor.u32 %s75, %s76
    %p78 = scmp.eq.s32.totalorder %s77, 0
    %s80 = sadd.s32 %s79, 1
    %s81 = scalar_select %p78, %s79, %s80
    %p84 = pneg %p78
    %p85 = scmp.eq.s32.totalorder %s8, 1
    %p86 = por %p84, %p85
    %p87 = scmp.ne.s32.totalorder %s79, %s82
    %p88 = scmp.eq.s32.totalorder %s8, 0
    %p89 = por %p87, %p88
    %p90 = scmp.ne.s32.totalorder %s79, %s82
    %p91 = scmp.eq.s32.totalorder %s13, 1
    %p92 = por %p90, %p91
    %p93 = scmp.ne.s32.totalorder %s82, %s83
    %p94 = scmp.eq.s32.totalorder %s13, 0
    %p95 = por %p93, %p94
    %p96 = scmp.ne.s32.totalorder %s82, %s83
    %p97 = scmp.eq.s32.totalorder %s14, 1
    %p98 = por %p96, %p97
    %p100 = scmp.ne.s32.totalorder %s83, %s99
    %p101 = scmp.eq.s32.totalorder %s14, 0
    %p102 = por %p100, %p101
    %s103 = ssub.s32 %s15, %s34
    %p104 = scmp.eq.s32.totalorder %s103, 0
    %s106 = sadd.s32 %s105, 1
    %s107 = scalar_select %p104, %s105, %s106
    %p110 = pneg %p104
    %p111 = scmp.eq.s32.totalorder %s8, 1
    %p112 = por %p110, %p111
    %p113 = scmp.ne.s32.totalorder %s105, %s108
    %p114 = scmp.eq.s32.totalorder %s8, 0
    %p115 = por %p113, %p114
    %p116 = scmp.ne.s32.totalorder %s105, %s108
    %p117 = scmp.eq.s32.totalorder %s13, 1
    %p118 = por %p116, %p117
    %p119 = scmp.ne.s32.totalorder %s108, %s109
    %p120 = scmp.eq.s32.totalorder %s13, 0
    %p121 = por %p119, %p120
    %p122 = scmp.ne.s32.totalorder %s108, %s109
    %p123 = scmp.eq.s32.totalorder %s14, 1
    %p124 = por %p122, %p123
    %p126 = scmp.ne.s32.totalorder %s109, %s125
    %p127 = scmp.eq.s32.totalorder %s14, 0
    %p128 = por %p126, %p127
    %p129 = scmp.le.s32.totalorder 1, %s8
    %p130 = scmp.lt.s32.totalorder %s8, 3
    %p131 = pnand %p129, %p130
    %p132 = pneg %p131
    // Predicated region
    $region9: #{xedice_loss.1} parent=5 // pred_check
      _
    $region10: #{xedice_loss.1} parent=5 // pred_check_branch
      %134 = sbr.rel (%p131) target = $region12
    $region11: #{xedice_loss.1} parent=5 // pred_region
      %s135 = ssub.s32 %s8, 1
    $region12: #{xedice_loss.1} parent=5 // pred_fallthru
      _
    %p136 = scmp.lt.s32.totalorder %s8, 2
    // Predicated region
    $region13: #{xedice_loss.1} parent=5 // pred_check
      %p137 = pneg %p136
    $region14: #{xedice_loss.1} parent=5 // pred_check_branch
      %139 = sbr.rel (%p137) target = $region16
    $region15: #{xedice_loss.1} parent=5 // pred_region
      // Predicated region
      $region17: #{xedice_loss.1} parent=15 // pred_check
        %p140 = pneg %p55
      $region18: #{xedice_loss.1} parent=15 // pred_check_branch
        %142 = sbr.rel (%p140) target = $region20
      $region19: #{xedice_loss.1} parent=15 // pred_region
        %s143 = sadd.s32 %s15, %s17
        %p144 = scmp.lt.s32.totalorder %s143, 0
        %s145 = scalar_select %p144, %s143, 0
        %p146 = scmp.lt.s32.totalorder %s16, 1
        %s147 = scalar_select %p146, %s16, 1
        %p148 = scmp.lt.s32.totalorder %s145, 0
        %s149 = scalar_select %p148, %s145, 0
        %s150 = smul.addr %s147, 4
        %s151 = sadd.s32 %s149, %s150
        %s152 = smul.addr %s151, 2
        %s153 = scalar_lea.vmem %s0, %s152
        %s154 = sadd.s32 %s15, %s17
        %p155 = scmp.lt.s32.totalorder %s154, 0
        %s156 = scalar_select %p155, %s154, 0
      $region20: #{xedice_loss.1} parent=15 // pred_fallthru
        _
      // Predicated region
      $region21: #{xedice_loss.1} parent=15 // pred_check
        %p157 = pneg %p89
      $region22: #{xedice_loss.1} parent=15 // pred_check_branch
        %159 = sbr.rel (%p157) target = $region24
      $region23: #{xedice_loss.1} parent=15 // pred_region
        %s160 = sadd.s32 %s15, %s17
        %p161 = scmp.lt.s32.totalorder %s160, 0
        %s162 = scalar_select %p161, %s160, 0
        %p163 = scmp.lt.s32.totalorder %s16, 1
        %s164 = scalar_select %p163, %s16, 1
        %p165 = scmp.lt.s32.totalorder %s162, 0
        %s166 = scalar_select %p165, %s162, 0
        %s167 = sadd.s32 %s166, %s164
        %s168 = smul.addr %s167, 2
        %s169 = scalar_lea.vmem %s1, %s168
        %s170 = sadd.s32 %s15, %s17
        %p171 = scmp.lt.s32.totalorder %s170, 0
        %s172 = scalar_select %p171, %s170, 0
      $region24: #{xedice_loss.1} parent=15 // pred_fallthru
        _
    $region16: #{xedice_loss.1} parent=5 // pred_fallthru
      _
    %p173 = scmp.le.s32.totalorder 1, %s8
    %p174 = scmp.lt.s32.totalorder %s8, 3
    %p175 = pnand %p173, %p174
    %p176 = pneg %p175
    // Predicated region
    $region25: #{xedice_loss.1} parent=5 // pred_check
      _
    $region26: #{xedice_loss.1} parent=5 // pred_check_branch
      %178 = sbr.rel (%p175) target = $region28
    $region27: #{xedice_loss.1} parent=5 // pred_region
      %s179 = ssub.s32 %s8, 1
      %s180 = sadd.s32 %s18, %s20
      %p181 = scmp.lt.s32.totalorder %s180, 0
      %s182 = scalar_select %p181, %s180, 0
      %p183 = scmp.lt.s32.totalorder %s19, 1
      %s184 = scalar_select %p183, %s19, 1
      %p185 = scmp.lt.s32.totalorder %s182, 0
      %s186 = scalar_select %p185, %s182, 0
      %s187 = smul.addr %s184, 4
      %s188 = sadd.s32 %s186, %s187
      %s189 = smul.addr %s188, 2
      %s190 = scalar_lea.vmem %s0, %s189
      %p191 = pneg %p61
      %p192 = pneg %p58
      %s193 = sadd.s32 %s18, %s20
      %p194 = scmp.lt.s32.totalorder %s193, 0
      %s195 = scalar_select %p194, %s193, 0
      %p196 = scmp.lt.s32.totalorder %s19, 1
      %s197 = scalar_select %p196, %s19, 1
      %p198 = scmp.lt.s32.totalorder %s195, 0
      %s199 = scalar_select %p198, %s195, 0
      %s200 = sadd.s32 %s199, %s197
      %s201 = smul.addr %s200, 2
      %s202 = scalar_lea.vmem %s1, %s201
      %p203 = pneg %p95
      %p204 = pneg %p92
      %p205 = pneg %p121
      %p206 = pneg %p118
      %p207 = scmp.lt.s32.totalorder %s18, 0
      %s208 = scalar_select %p207, %s18, 0
      %s209 = smul.addr %s208, 4
      %s210 = smul.addr %s209, 8
      %s211 = scalar_lea.vmem %s2, %s210
      %s212 = sadd.s32 %s18, %s20
      %p213 = scmp.lt.s32.totalorder %s212, 0
      %s214 = scalar_select %p213, %s212, 0
      %p215 = scmp.lt.s32.totalorder %s19, 1
      %s216 = scalar_select %p215, %s19, 1
      %p217 = scmp.lt.s32.totalorder %s214, 0
      %s218 = scalar_select %p217, %s214, 0
      %s219 = smul.addr %s216, 4
      %s220 = sadd.s32 %s218, %s219
      %s221 = smul.addr %s220, 2
      %s222 = scalar_lea.vmem %s0, %s221
      %s223 = sadd.s32 %s18, %s20
      %p224 = scmp.lt.s32.totalorder %s223, 0
      %s225 = scalar_select %p224, %s223, 0
      %s226 = sadd.s32 %s18, %s20
      %p227 = scmp.lt.s32.totalorder %s226, 0
      %s228 = scalar_select %p227, %s226, 0
      %p229 = scmp.lt.s32.totalorder %s19, 1
      %s230 = scalar_select %p229, %s19, 1
      %p231 = scmp.lt.s32.totalorder %s228, 0
      %s232 = scalar_select %p231, %s228, 0
      %s233 = sadd.s32 %s232, %s230
      %s234 = smul.addr %s233, 2
      %s235 = scalar_lea.vmem %s1, %s234
      %s236 = sadd.s32 %s18, %s20
      %p237 = scmp.lt.s32.totalorder %s236, 0
      %s238 = scalar_select %p237, %s236, 0
      %p239 = scmp.lt.s32.totalorder %s18, 0
      %s240 = scalar_select %p239, %s18, 0
      %s241 = smul.addr %s240, 4
      %s242 = smul.addr %s241, 8
      %s243 = scalar_lea.vmem %s2, %s242
      %p244 = scmp.eq.s32.totalorder %s19, 0
      %p245 = scmp.eq.s32.totalorder %s20, 0
      %p246 = pnand %p244, %p245
      %p247 = pneg %p246
      // Predicated region
      $region29: #{xedice_loss.1} parent=27 // pred_check
        _
      $region30: #{xedice_loss.1} parent=27 // pred_check_branch
        %249 = sbr.rel (%p246) target = $region32
      $region31: #{xedice_loss.1} parent=27 // pred_region
        %250 = vst [vmem:[%s243] sm:$0xff] 0.0
        %251 = vst [vmem:[%s243 + $0x8] sm:$0xff] 0.0
        %252 = vst [vmem:[%s243 + $0x10] sm:$0xff] 0.0
        %253 = vst [vmem:[%s243 + $0x18] sm:$0xff] 0.0
      $region32: #{xedice_loss.1} parent=27 // pred_fallthru
        _
      %s254 = sadd.s32 %s18, %s20
      %p255 = scmp.lt.s32.totalorder %s254, 1
      // Predicated region
      $region33: #{xedice_loss.1} parent=27 // pred_check
        %p256 = pneg %p255
      $region34: #{xedice_loss.1} parent=27 // pred_check_branch
        %258 = sbr.rel (%p256) target = $region36
      $region35: #{xedice_loss.1} parent=27 // pred_region
        %v259 = vld [vmem:[%s222] sm:$0x3]
        %v260 = vld [vmem:[%s222 + $0x2] sm:$0x3]
        %v261 = vld [vmem:[%s222 + $0x4] sm:$0x3]
        %v262 = vld [vmem:[%s222 + $0x6] sm:$0x3]
        %v263 = vld [vmem:[%s235] sm:$0x3]
        %v264 = vlaneseq
        %v265 = vshrl.u32 %v264, 7
        %v266 = vlaneseq
        %v267 = vand.u32 %v266, 127
        %s268 = smul.u32 %s254, 2
        %v269 = vstv %s268
        %v270 = vadd.s32 %v269, %v265
        %v271 = vmul.u32 %v270, 128
        %v272 = vadd.s32 %v271, %v267
        %vm273 = vcmp.lt.s32.totalorder %v272, 256
        %vm274 = vcmask 1041408
        %v275 = vsel %vm274, %v259, -inf
        %v276 = vsel %vm274, %v260, -inf
        %v277 = vsel %vm274, %v261, -inf
        %v278 = vsel %vm274, %v262, -inf
        %v279 = vmax.f32 %v275, %v276
        %v280 = vmax.f32 %v277, %v278
        %v281 = vmax.f32 %v279, %v280
        %v282 = vsub.f32 %v259, %v281
        %v283 = vsub.f32 %v260, %v281
        %v284 = vsub.f32 %v261, %v281
        %v285 = vsub.f32 %v262, %v281
        %v286 = vmul.f32 %v282, 1.442695
        %v287 = vpow.pop %v286
        %v288 = vmul.f32 %v283, 1.442695
        %v289 = vpow.pop %v288
        %v290 = vmul.f32 %v284, 1.442695
        %v291 = vpow.pop %v290
        %v292 = vmul.f32 %v285, 1.442695
        %v293 = vpow.pop %v292
        %v294 = vsel %vm274, %v287, 0.0
        %v295 = vsel %vm274, %v289, 0.0
        %v296 = vadd.f32 %v294, %v295
        %v297 = vsel %vm274, %v291, 0.0
        %v298 = vadd.f32 %v296, %v297
        %v299 = vsel %vm274, %v293, 0.0
        %v300 = vadd.f32 %v298, %v299
        %v301 = vrcp.pop %v300
        %vm302 = vcmp.eq.s32.totalorder %v263, 0
        %vm303 = vcmp.eq.s32.totalorder %v263, 1
        %vm304 = vcmp.eq.s32.totalorder %v263, 2
        %vm305 = vcmp.eq.s32.totalorder %v263, 3
        %v306 = vsel %vm302, %v259, 0.0
        %v307 = vsel %vm303, %v260, 0.0
        %v308 = vsel %vm304, %v261, 0.0
        %v309 = vsel %vm305, %v262, 0.0
        %v310 = vsel %vm274, %v306, 0.0
        %v311 = vsel %vm274, %v307, 0.0
        %v312 = vadd.f32 %v310, %v311
        %v313 = vsel %vm274, %v308, 0.0
        %v314 = vadd.f32 %v312, %v313
        %v315 = vsel %vm274, %v309, 0.0
        %v316 = vadd.f32 %v314, %v315
        %v317 = vlog2.pop %v300
        %v318 = vmul.f32 %v317, 0.6931472
        %v319 = vadd.f32 %v318, %v281
        %v320 = vsub.f32 %v319, %v316
        %v321 = vsel %vm273, %v320, 0.0
        %v322 = vmul.f32 %v289, %v301
        %v323 = vsel %vm273, %v322, 0.0
        %vm324 = vmand %vm273, %vm303
        %v325 = vsel %vm324, 1.0, 0.0
        %v326 = vld [vmem:[%s243] sm:$0x3]
        %v327 = vadd.f32 %v326, %v321
        %328 = vst [vmem:[%s243] sm:$0x3] %v327
        %v329 = vmul.f32 %v323, %v325
        %s330 = scalar_lea.vmem %s243, 8
        %v331 = vld [vmem:[%s330] sm:$0x3]
        %v332 = vadd.f32 %v331, %v329
        %333 = vst [vmem:[%s330] sm:$0x3] %v332
        %s334 = scalar_lea.vmem %s243, 16
        %v335 = vld [vmem:[%s334] sm:$0x3]
        %v336 = vadd.f32 %v335, %v323
        %337 = vst [vmem:[%s334] sm:$0x3] %v336
        %s338 = scalar_lea.vmem %s243, 24
        %v339 = vld [vmem:[%s338] sm:$0x3]
        %v340 = vadd.f32 %v339, %v325
        %341 = vst [vmem:[%s338] sm:$0x3] %v340
      $region36: #{xedice_loss.1} parent=27 // pred_fallthru
        _
      %p342 = scmp.lt.s32.totalorder %s18, 0
      %s343 = scalar_select %p342, %s18, 0
      %s344 = smul.addr %s343, 4
      %s345 = smul.addr %s344, 8
      %s346 = scalar_lea.vmem %s2, %s345
      // Predicated region
      $region37: #{xedice_loss.1} parent=27 // pred_check
        %p347 = pneg %p118
      $region38: #{xedice_loss.1} parent=27 // pred_check_branch
        %349 = sbr.rel (%p347) target = $region40
      $region39: #{xedice_loss.1} parent=27 // pred_region
        _
      $region40: #{xedice_loss.1} parent=27 // pred_fallthru
        _
      // Predicated region
      $region41: #{xedice_loss.1} parent=27 // pred_check
        %p350 = pneg %p118
      $region42: #{xedice_loss.1} parent=27 // pred_check_branch
        %352 = sbr.rel (%p350) target = $region44
      $region43: #{xedice_loss.1} parent=27 // pred_region
        %p353 = scmp.lt.s32.totalorder %s18, 0
        %s354 = scalar_select %p353, %s18, 0
        %s355 = smul.addr %s354, 4
        %s356 = smul.addr %s355, 8
        %s357 = scalar_lea.vmem %s2, %s356
      $region44: #{xedice_loss.1} parent=27 // pred_fallthru
        _
    $region28: #{xedice_loss.1} parent=5 // pred_fallthru
      _
    %p358 = scmp.le.s32.totalorder 2, %s8
    // Predicated region
    $region45: #{xedice_loss.1} parent=5 // pred_check
      %p359 = pneg %p358
    $region46: #{xedice_loss.1} parent=5 // pred_check_branch
      %361 = sbr.rel (%p359) target = $region48
    $region47: #{xedice_loss.1} parent=5 // pred_region
      %s362 = ssub.s32 %s8, 2
    $region48: #{xedice_loss.1} parent=5 // pred_fallthru
      _
  $region6: #{xedice_loss.1} parent=0 // loop_footer
    %s12 = sadd.s32 1, %s8
  $region7: #{xedice_loss.1} parent=0 // loop_footer_branch
    %7 = sbr.rel target = $region3
  $region8: #{xedice_loss.1} parent=0 // loop_exit
    _

</llo_original>
